<compile_context>
chip_gen: v7x
topology: tpu7x:2x2x1
jax: 0.10.0
libtpu: 0.0.40
codegen_flags: <defaults>
</compile_context>

<pallas_src>
import jax
import jax.numpy as jnp
from jax.experimental import pallas as pl
from jax.experimental.pallas import tpu as pltpu


def _cdiv(a, b):
    return -(-a // b)


def _round_up(a, b):
    return _cdiv(a, b) * b


def _sublane_multiple(dtype):
    # Native sublane packing: f32 -> 8, bf16 -> 16, int8/fp8 -> 32.
    return 32 // jnp.dtype(dtype).itemsize


def _choose_row_block(R, sub):
    """Row-block size: a multiple of `sub` dividing R (preferring >= 2 blocks),
    or the full extent R when R is not a multiple of `sub`."""
    if R % sub != 0 or R <= sub:
        return R
    cap = max(sub, min(R // 2, 1024))
    t = cap - (cap % sub)
    while t >= sub:
        if R % t == 0:
            return t
        t -= sub
    return R


def _make_kernel(tr, tm, S, K, Kp, needs_mask):
    def kernel(l_ref, t_ref, o_ref, acc_i, acc_l, acc_t):
        k = pl.program_id(2)

        @pl.when(k == 0)
        def _init():
            acc_i[...] = jnp.zeros_like(acc_i)
            acc_l[...] = jnp.zeros_like(acc_l)
            acc_t[...] = jnp.zeros_like(acc_t)

        g = pl.program_id(1) * Kp + k  # global reduction-block index

        def accumulate(l, t):
            acc_i[...] += jnp.sum(l * t, axis=1, keepdims=True)
            acc_l[...] += jnp.sum(l, axis=1, keepdims=True)
            acc_t[...] += jnp.sum(t, axis=1, keepdims=True)

        # Fast path: full, in-range blocks -> no mask work at all.
        n_full = K - 1 if needs_mask else K

        @pl.when(g < n_full)
        def _full():
            accumulate(l_ref[...].astype(jnp.float32),
                       t_ref[...].astype(jnp.float32))

        if needs_mask:
            # Masked path runs ONLY on the single partial tail block. The mask
            # is applied BEFORE the multiply / sums so OOB garbage (even NaNs)
            # in the padded region never reaches the accumulators.
            @pl.when(g == K - 1)
            def _tail():
                l = l_ref[...].astype(jnp.float32)
                t = t_ref[...].astype(jnp.float32)
                lane = jax.lax.broadcasted_iota(jnp.int32, (tr, tm), 1)
                valid = lane < (S - (K - 1) * tm)
                accumulate(jnp.where(valid, l, 0.0), jnp.where(valid, t, 0.0))

        # Steps with g >= K (clamped duplicate blocks of an uneven reduction
        # split) are skipped by both branches above.

        @pl.when(k == Kp - 1)
        def _finalize():
            o_ref[...] = jnp.concatenate(
                [acc_i[...], acc_l[...], acc_t[...]], axis=1)[None]

    return kernel


def _per_row_sums(x, y, *, target_block_bytes=2 << 20):
    """x, y: (R, S) arrays. Returns (R, 3) f32 [inter, sum_x, sum_y] per row.

    target_block_bytes ~2 MiB: safe under v5e's 16 MiB scoped-VMEM default and
    v7x's 64 MiB physical VMEM; already near the HBM-roofline plateau.
    """
    R, S = x.shape
    max_itemsize = max(x.dtype.itemsize, y.dtype.itemsize)
    sub = max(_sublane_multiple(x.dtype), _sublane_multiple(y.dtype))

    # Row blocking ("parallel" axis).
    tr = _choose_row_block(R, sub)
    nr = R // tr

    # Lane tile: ~target_block_bytes per input per grid step, multiple of 128.
    tm = max(128, (target_block_bytes // (tr * max_itemsize)) // 128 * 128)
    tm = min(tm, _round_up(S, 128))
    K = _cdiv(S, tm)

    # Fallback 2-way reduction split only when row blocking cannot feed both
    # v7x TensorCores (tiny N*C).
    P = 2 if (nr == 1 and K >= 2) else 1
    Kp = _cdiv(K, P)

    needs_mask = (K * tm) != S

    if P * Kp == K:
        def red_idx(p, k):
            return p * Kp + k
    else:
        # Uneven split: clamp so no DMA ever indexes past the last real block;
        # the duplicate block is discarded in-kernel via the `g < K` guard.
        def red_idx(p, k):
            return jnp.minimum(p * Kp + k, K - 1)

    kernel = _make_kernel(tr, tm, S, K, Kp, needs_mask)

    out = pl.pallas_call(
        kernel,
        out_shape=jax.ShapeDtypeStruct((P, R, 3), jnp.float32),
        grid_spec=pltpu.PrefetchScalarGridSpec(
            num_scalar_prefetch=0,
            grid=(nr, P, Kp),
            in_specs=[
                pl.BlockSpec((tr, tm), lambda r, p, k: (r, red_idx(p, k))),
                pl.BlockSpec((tr, tm), lambda r, p, k: (r, red_idx(p, k))),
            ],
            out_specs=pl.BlockSpec((1, tr, 3), lambda r, p, k: (p, r, 0)),
            scratch_shapes=[
                pltpu.VMEM((tr, 1), jnp.float32),
                pltpu.VMEM((tr, 1), jnp.float32),
                pltpu.VMEM((tr, 1), jnp.float32),
            ],
        ),
        compiler_params=pltpu.CompilerParams(
            dimension_semantics=("parallel", "parallel", "arbitrary"),
        ),
        cost_estimate=pl.CostEstimate(
            flops=4 * R * S,
            transcendentals=0,
            bytes_accessed=R * S * (x.dtype.itemsize + y.dtype.itemsize)
            + P * R * 3 * 4,
        ),
    )(x, y)

    return jnp.sum(out, axis=0)  # (R, 3); trivial when P == 1


@jax.jit
def dice_mean_loss(logits, targets):
    """logits, targets: (N, C, D, H, W). Returns the mean dice over classes
    (same semantics as the PyTorch module: dice_sum / class_num).

    Callers may pass bf16 logits / int8 targets; the kernel casts to f32
    internally and accumulates in f32."""
    N, C = logits.shape[0], logits.shape[1]
    S = 1
    for d in logits.shape[2:]:
        S *= d

    # Free reshape (no transpose, no HBM copy): NCDHW -> (N*C, D*H*W).
    x = logits.reshape(N * C, S)
    y = targets.reshape(N * C, S)

    sums = _per_row_sums(x, y)                   # (N*C, 3) f32
    sums = sums.reshape(N, C, 3).sum(axis=0)     # (C, 3): reduce over batch
    inter, sum_l, sum_t = sums[:, 0], sums[:, 1], sums[:, 2]
    dice_per_class = (2.0 * inter + 1.0) / (sum_l + sum_t + 1.0)
    return jnp.sum(dice_per_class) / C


def _reference(logits, targets):
    """Pure-JAX reference mirroring the PyTorch forward."""
    l = logits.astype(jnp.float32)
    t = targets.astype(jnp.float32)
    C = l.shape[1]
    dice_sum = 0.0
    for i in range(C):
        inter = jnp.sum(l[:, i] * t[:, i])
        union = jnp.sum(l[:, i]) + jnp.sum(t[:, i])
        dice_sum = dice_sum + (2.0 * inter + 1.0) / (union + 1.0)
    return dice_sum / C


if __name__ == "__main__":
    key = jax.random.PRNGKey(0)
    k1, k2, k3, k4 = jax.random.split(key, 4)

    # Case 1: small NCDHW volume (single block, no split, no mask).
    shape1 = (2, 4, 8, 16, 16)
    logits1 = jax.nn.sigmoid(jax.random.normal(k1, shape1, dtype=jnp.float32))
    targets1 = (jax.random.uniform(k2, shape1) > 0.5).astype(jnp.float32)
    out1 = jax.block_until_ready(dice_mean_loss(logits1, targets1))
    ref1 = _reference(logits1, targets1)
    assert jnp.allclose(out1, ref1, rtol=1e-5, atol=1e-5), (out1, ref1)

    # Case 2: larger volume exercising multiple reduction blocks, the 2-way
    # "parallel" reduction split and the gated partial-tail mask.
    shape2 = (2, 4, 10, 100, 100)
    logits2 = jax.nn.sigmoid(jax.random.normal(k3, shape2, dtype=jnp.float32))
    targets2 = (jax.random.uniform(k4, shape2) > 0.5).astype(jnp.float32)
    out2 = jax.block_until_ready(dice_mean_loss(logits2, targets2))
    ref2 = _reference(logits2, targets2)
    assert jnp.allclose(out2, ref2, rtol=1e-5, atol=1e-5), (out2, ref2)

    # Case 3: narrow input dtypes (bf16 logits, int8 targets) — HBM-byte cut,
    # in-kernel f32 cast/accumulation.
    logits3 = logits1.astype(jnp.bfloat16)
    targets3 = targets1.astype(jnp.int8)
    out3 = jax.block_until_ready(dice_mean_loss(logits3, targets3))
    ref3 = _reference(logits3, targets3)
    assert jnp.allclose(out3, ref3, rtol=1e-4, atol=1e-4), (out3, ref3)

    print("KERNEL_OK")
</pallas_src>

<mosaic_0001>
module attributes {stable_mosaic.version = 11 : i64} {
  func.func @kernel(%arg0: i32, %arg1: i32, %arg2: i32, %arg3: memref<8x2048xf32, #tpu.memory_space<vmem>>, %arg4: memref<8x2048xf32, #tpu.memory_space<vmem>>, %arg5: memref<1x8x3xf32, #tpu.memory_space<vmem>>, %arg6: memref<8x1xf32, #tpu.memory_space<vmem>>, %arg7: memref<8x1xf32, #tpu.memory_space<vmem>>, %arg8: memref<8x1xf32, #tpu.memory_space<vmem>>) attributes {dimension_semantics = [#tpu.dimension_semantics<parallel>, #tpu.dimension_semantics<parallel>, #tpu.dimension_semantics<arbitrary>], iteration_bounds = array<i64: 1, 1, 1>, scalar_prefetch = 0 : i64, scratch_operands = 3 : i64, tpu.core_type = #tpu.core_type<tc>, window_params = [{transform_indices = @transform_0, window_bounds = array<i64: 8, 2048>}, {transform_indices = @transform_1, window_bounds = array<i64: 8, 2048>}, {transform_indices = @transform_2, window_bounds = array<i64: 1, 8, 3>}]} {
    %c0_i32 = arith.constant 0 : i32
    %0 = arith.cmpi eq, %arg2, %c0_i32 : i32
    %1 = arith.extui %0 : i1 to i32
    %c0_i32_0 = arith.constant 0 : i32
    %2 = arith.cmpi ne, %1, %c0_i32_0 : i32
    scf.if %2 {
      %cst = arith.constant 0.000000e+00 : f32
      %11 = vector.broadcast %cst : f32 to vector<8x1xf32>
      %c0 = arith.constant 0 : index
      %c0_5 = arith.constant 0 : index
      %12 = vector.load %arg6[%c0, %c0_5] : memref<8x1xf32, #tpu.memory_space<vmem>>, vector<8x1xf32>
      tpu.vector_store %arg6[%c0, %c0_5], %11 {strides = array<i32>} : memref<8x1xf32, #tpu.memory_space<vmem>>, vector<8x1xf32>,
      %cst_6 = arith.constant 0.000000e+00 : f32
      %13 = vector.broadcast %cst_6 : f32 to vector<8x1xf32>
      %c0_7 = arith.constant 0 : index
      %c0_8 = arith.constant 0 : index
      %14 = vector.load %arg7[%c0_7, %c0_8] : memref<8x1xf32, #tpu.memory_space<vmem>>, vector<8x1xf32>
      tpu.vector_store %arg7[%c0_7, %c0_8], %13 {strides = array<i32>} : memref<8x1xf32, #tpu.memory_space<vmem>>, vector<8x1xf32>,
      %cst_9 = arith.constant 0.000000e+00 : f32
      %15 = vector.broadcast %cst_9 : f32 to vector<8x1xf32>
      %c0_10 = arith.constant 0 : index
      %c0_11 = arith.constant 0 : index
      %16 = vector.load %arg8[%c0_10, %c0_11] : memref<8x1xf32, #tpu.memory_space<vmem>>, vector<8x1xf32>
      tpu.vector_store %arg8[%c0_10, %c0_11], %15 {strides = array<i32>} : memref<8x1xf32, #tpu.memory_space<vmem>>, vector<8x1xf32>,
    } else {
    }
    %c1_i32 = arith.constant 1 : i32
    %3 = arith.muli %arg1, %c1_i32 : i32
    %4 = arith.addi %3, %arg2 : i32
    %c1_i32_1 = arith.constant 1 : i32
    %5 = arith.cmpi slt, %4, %c1_i32_1 : i32
    %6 = arith.extui %5 : i1 to i32
    %c0_i32_2 = arith.constant 0 : i32
    %7 = arith.cmpi ne, %6, %c0_i32_2 : i32
    scf.if %7 {
      %c0 = arith.constant 0 : index
      %c0_5 = arith.constant 0 : index
      %11 = vector.load %arg3[%c0, %c0_5] : memref<8x2048xf32, #tpu.memory_space<vmem>>, vector<8x2048xf32>
      %c0_6 = arith.constant 0 : index
      %c0_7 = arith.constant 0 : index
      %12 = vector.load %arg4[%c0_6, %c0_7] : memref<8x2048xf32, #tpu.memory_space<vmem>>, vector<8x2048xf32>
      %c0_8 = arith.constant 0 : index
      %c0_9 = arith.constant 0 : index
      %13 = vector.load %arg6[%c0_8, %c0_9] : memref<8x1xf32, #tpu.memory_space<vmem>>, vector<8x1xf32>
      %14 = arith.mulf %11, %12 : vector<8x2048xf32>
      %cst = arith.constant dense<0.000000e+00> : vector<8xf32>
      %15 = vector.multi_reduction <add>, %14, %cst [1] : vector<8x2048xf32> to vector<8xf32>
      %16 = vector.shape_cast %15 : vector<8xf32> to vector<8x1xf32>
      %17 = arith.addf %13, %16 : vector<8x1xf32>
      %c0_10 = arith.constant 0 : index
      %c0_11 = arith.constant 0 : index
      %18 = vector.load %arg6[%c0_10, %c0_11] : memref<8x1xf32, #tpu.memory_space<vmem>>, vector<8x1xf32>
      tpu.vector_store %arg6[%c0_10, %c0_11], %17 {strides = array<i32>} : memref<8x1xf32, #tpu.memory_space<vmem>>, vector<8x1xf32>,
      %c0_12 = arith.constant 0 : index
      %c0_13 = arith.constant 0 : index
      %19 = vector.load %arg7[%c0_12, %c0_13] : memref<8x1xf32, #tpu.memory_space<vmem>>, vector<8x1xf32>
      %cst_14 = arith.constant dense<0.000000e+00> : vector<8xf32>
      %20 = vector.multi_reduction <add>, %11, %cst_14 [1] : vector<8x2048xf32> to vector<8xf32>
      %21 = vector.shape_cast %20 : vector<8xf32> to vector<8x1xf32>
      %22 = arith.addf %19, %21 : vector<8x1xf32>
      %c0_15 = arith.constant 0 : index
      %c0_16 = arith.constant 0 : index
      %23 = vector.load %arg7[%c0_15, %c0_16] : memref<8x1xf32, #tpu.memory_space<vmem>>, vector<8x1xf32>
      tpu.vector_store %arg7[%c0_15, %c0_16], %22 {strides = array<i32>} : memref<8x1xf32, #tpu.memory_space<vmem>>, vector<8x1xf32>,
      %c0_17 = arith.constant 0 : index
      %c0_18 = arith.constant 0 : index
      %24 = vector.load %arg8[%c0_17, %c0_18] : memref<8x1xf32, #tpu.memory_space<vmem>>, vector<8x1xf32>
      %cst_19 = arith.constant dense<0.000000e+00> : vector<8xf32>
      %25 = vector.multi_reduction <add>, %12, %cst_19 [1] : vector<8x2048xf32> to vector<8xf32>
      %26 = vector.shape_cast %25 : vector<8xf32> to vector<8x1xf32>
      %27 = arith.addf %24, %26 : vector<8x1xf32>
      %c0_20 = arith.constant 0 : index
      %c0_21 = arith.constant 0 : index
      %28 = vector.load %arg8[%c0_20, %c0_21] : memref<8x1xf32, #tpu.memory_space<vmem>>, vector<8x1xf32>
      tpu.vector_store %arg8[%c0_20, %c0_21], %27 {strides = array<i32>} : memref<8x1xf32, #tpu.memory_space<vmem>>, vector<8x1xf32>,
    } else {
    }
    %c0_i32_3 = arith.constant 0 : i32
    %8 = arith.cmpi eq, %arg2, %c0_i32_3 : i32
    %9 = arith.extui %8 : i1 to i32
    %c0_i32_4 = arith.constant 0 : i32
    %10 = arith.cmpi ne, %9, %c0_i32_4 : i32
    scf.if %10 {
      %c0 = arith.constant 0 : index
      %c0_5 = arith.constant 0 : index
      %11 = vector.load %arg6[%c0, %c0_5] : memref<8x1xf32, #tpu.memory_space<vmem>>, vector<8x1xf32>
      %c0_6 = arith.constant 0 : index
      %c0_7 = arith.constant 0 : index
      %12 = vector.load %arg7[%c0_6, %c0_7] : memref<8x1xf32, #tpu.memory_space<vmem>>, vector<8x1xf32>
      %c0_8 = arith.constant 0 : index
      %c0_9 = arith.constant 0 : index
      %13 = vector.load %arg8[%c0_8, %c0_9] : memref<8x1xf32, #tpu.memory_space<vmem>>, vector<8x1xf32>
      %14 = tpu.concatenate %11, %12, %13 in 1 : vector<8x1xf32>, vector<8x1xf32>, vector<8x1xf32> -> vector<8x3xf32>
      %15 = vector.shape_cast %14 : vector<8x3xf32> to vector<1x8x3xf32>
      %c0_10 = arith.constant 0 : index
      %c0_11 = arith.constant 0 : index
      %c0_12 = arith.constant 0 : index
      %16 = vector.load %arg5[%c0_10, %c0_11, %c0_12] : memref<1x8x3xf32, #tpu.memory_space<vmem>>, vector<1x8x3xf32>
      tpu.vector_store %arg5[%c0_10, %c0_11, %c0_12], %15 {strides = array<i32>} : memref<1x8x3xf32, #tpu.memory_space<vmem>>, vector<1x8x3xf32>,
    } else {
    }
    return
  }
  func.func @transform_0(%arg0: i32, %arg1: i32, %arg2: i32) -> (i32, i32) {
    %c1_i32 = arith.constant 1 : i32
    %0 = arith.muli %arg1, %c1_i32 : i32
    %1 = arith.addi %0, %arg2 : i32
    %c0_i32 = arith.constant 0 : i32
    return %arg0, %1 : i32, i32
  }
  func.func @transform_1(%arg0: i32, %arg1: i32, %arg2: i32) -> (i32, i32) {
    %c1_i32 = arith.constant 1 : i32
    %0 = arith.muli %arg1, %c1_i32 : i32
    %1 = arith.addi %0, %arg2 : i32
    %c0_i32 = arith.constant 0 : i32
    return %arg0, %1 : i32, i32
  }
  func.func @transform_2(%arg0: i32, %arg1: i32, %arg2: i32) -> (i32, i32, i32) {
    %c0_i32 = arith.constant 0 : i32
    %c0_i32_0 = arith.constant 0 : i32
    return %arg1, %arg0, %c0_i32 : i32, i32, i32
  }
}

</mosaic_0001>

<llo_original>
// kernel: dice_mean_loss.1
$region0: #{dice_mean_loss.1}
  #allocation0 [shape = 'u32[]', space=smem, size = 0x4, offset = 0x4, fixed_abs, tag = 'smem constant byte address 0x4 - core index']
  #allocation1 [shape = 'u32[144,128]{1,0:T(1,128)}', space=vmem, size = 0x12000, scoped, tag = 'internal scratch']
  #allocation2 [shape = 'f32[8,1]{1,0:T(8,128)}', space=vmem, size = 0x1000, scoped, tag = 'scratch operand']
  #allocation3 [shape = 'f32[8,1]{1,0:T(8,128)}', space=vmem, size = 0x1000, scoped, tag = 'scratch operand']
  #allocation4 [shape = 'f32[8,1]{1,0:T(8,128)}', space=vmem, size = 0x1000, scoped, tag = 'scratch operand']
  %s0 = inlined_call_operand.vmem [shape: f32[8,2048], index: 0, kind: input, shape index: {}]
  %s1 = inlined_call_operand.vmem [shape: f32[8,2048], index: 1, kind: input, shape index: {}]
  %s2 = inlined_call_operand.vmem [shape: f32[1,8,3], index: 2, kind: output, shape index: {}]
  %s3 = sld [smem:[#allocation0]]
  $region30: #{dice_mean_loss.1} parent=0
    _
  %s5 = ssub.s32 1, %s3
  %s6 = scalar_select 0, %s5, %s3
  // Predicated region
  $region2: #{dice_mean_loss.1} parent=0 // pred_check
    _
  $region3: #{dice_mean_loss.1} parent=0 // pred_check_branch
    %8 = sbr.rel (0) target = $region5
  $region4: #{dice_mean_loss.1} parent=0 // pred_region
    %s9 = sadd.s32 0, 0
    %s10 = smul.u32 16, %s9
    %p11 = scmp.lt.s32.totalorder %s10, 15
    %s12 = scalar_select %p11, %s10, 15
    %s13 = smul.addr %s12, 8
    %s14 = scalar_lea.vmem %s0, %s13
    %s15 = sadd.s32 0, 0
    %s16 = smul.u32 16, %s15
  $region5: #{dice_mean_loss.1} parent=0 // pred_fallthru
    _
  // Predicated region
  $region6: #{dice_mean_loss.1} parent=0 // pred_check
    _
  $region7: #{dice_mean_loss.1} parent=0 // pred_check_branch
    %18 = sbr.rel (0) target = $region9
  $region8: #{dice_mean_loss.1} parent=0 // pred_region
    %s19 = sadd.s32 0, 0
    %s20 = smul.u32 16, %s19
    %p21 = scmp.lt.s32.totalorder %s20, 15
    %s22 = scalar_select %p21, %s20, 15
    %s23 = smul.addr %s22, 8
    %s24 = scalar_lea.vmem %s1, %s23
    %s25 = sadd.s32 0, 0
    %s26 = smul.u32 16, %s25
  $region9: #{dice_mean_loss.1} parent=0 // pred_fallthru
    _
  %s27 = sadd.s32 0, 0
  %s28 = smul.u32 16, %s27
  %p29 = scmp.lt.s32.totalorder %s28, 15
  %s30 = scalar_select %p29, %s28, 15
  %s31 = smul.addr %s30, 8
  %s32 = scalar_lea.vmem %s0, %s31
  %s33 = sadd.s32 0, 0
  %s34 = smul.u32 16, %s33
  %p35 = scmp.lt.s32.totalorder %s34, 15
  %s36 = scalar_select %p35, %s34, 15
  %s37 = smul.addr %s36, 8
  %s38 = scalar_lea.vmem %s1, %s37
  %s39 = sadd.s32 0, 0
  %s40 = smul.u32 16, %s39
  %p41 = scmp.lt.s32.totalorder %s40, 15
  %s42 = scalar_select %p41, %s40, 15
  %s43 = smul.addr %s42, 8
  %s44 = scalar_lea.vmem %s0, %s43
  %s45 = sadd.s32 0, 0
  %s46 = smul.u32 16, %s45
  %s47 = sadd.s32 0, 0
  %s48 = smul.u32 16, %s47
  %p49 = scmp.lt.s32.totalorder %s48, 15
  %s50 = scalar_select %p49, %s48, 15
  %s51 = smul.addr %s50, 8
  %s52 = scalar_lea.vmem %s1, %s51
  %s53 = sadd.s32 0, 0
  %s54 = smul.u32 16, %s53
  %p55 = scmp.eq.s32.totalorder 0, 0
  // Predicated region
  $region10: #{dice_mean_loss.1} parent=0 // pred_check
    %p56 = pneg %p55
  $region11: #{dice_mean_loss.1} parent=0 // pred_check_branch
    %58 = sbr.rel (%p56) target = $region13
  $region12: #{dice_mean_loss.1} parent=0 // pred_region
    %vm59 = vcmask 7168
    %60 = vst.msk [vmem:[#allocation2] sm:$0xff] %vm59, 0.0
    %61 = vst.msk [vmem:[#allocation3] sm:$0xff] %vm59, 0.0
    %62 = vst.msk [vmem:[#allocation4] sm:$0xff] %vm59, 0.0
  $region13: #{dice_mean_loss.1} parent=0 // pred_fallthru
    _
  %s63 = sadd.s32 0, 0
  %p64 = scmp.lt.s32.totalorder %s63, 1
  // Predicated region
  $region14: #{dice_mean_loss.1} parent=0 // pred_check
    %p65 = pneg %p64
  $region15: #{dice_mean_loss.1} parent=0 // pred_check_branch
    %67 = sbr.rel (%p65) target = $region17
  $region16: #{dice_mean_loss.1} parent=0 // pred_region
    %v68 = vld [vmem:[%s44] sm:$0xff]
    %v69 = vld [vmem:[%s44 + $0x8] sm:$0xff]
    %v70 = vld [vmem:[%s44 + $0x10] sm:$0xff]
    %v71 = vld [vmem:[%s44 + $0x18] sm:$0xff]
    %v72 = vld [vmem:[%s44 + $0x20] sm:$0xff]
    %v73 = vld [vmem:[%s44 + $0x28] sm:$0xff]
    %v74 = vld [vmem:[%s44 + $0x30] sm:$0xff]
    %v75 = vld [vmem:[%s44 + $0x38] sm:$0xff]
    %v76 = vld [vmem:[%s44 + $0x40] sm:$0xff]
    %v77 = vld [vmem:[%s44 + $0x48] sm:$0xff]
    %v78 = vld [vmem:[%s44 + $0x50] sm:$0xff]
    %v79 = vld [vmem:[%s44 + $0x58] sm:$0xff]
    %v80 = vld [vmem:[%s44 + $0x60] sm:$0xff]
    %v81 = vld [vmem:[%s44 + $0x68] sm:$0xff]
    %v82 = vld [vmem:[%s44 + $0x70] sm:$0xff]
    %v83 = vld [vmem:[%s44 + $0x78] sm:$0xff]
    %v84 = vld [vmem:[%s52] sm:$0xff]
    %v85 = vld [vmem:[%s52 + $0x8] sm:$0xff]
    %v86 = vld [vmem:[%s52 + $0x10] sm:$0xff]
    %v87 = vld [vmem:[%s52 + $0x18] sm:$0xff]
    %v88 = vld [vmem:[%s52 + $0x20] sm:$0xff]
    %v89 = vld [vmem:[%s52 + $0x28] sm:$0xff]
    %v90 = vld [vmem:[%s52 + $0x30] sm:$0xff]
    %v91 = vld [vmem:[%s52 + $0x38] sm:$0xff]
    %v92 = vld [vmem:[%s52 + $0x40] sm:$0xff]
    %v93 = vld [vmem:[%s52 + $0x48] sm:$0xff]
    %v94 = vld [vmem:[%s52 + $0x50] sm:$0xff]
    %v95 = vld [vmem:[%s52 + $0x58] sm:$0xff]
    %v96 = vld [vmem:[%s52 + $0x60] sm:$0xff]
    %v97 = vld [vmem:[%s52 + $0x68] sm:$0xff]
    %v98 = vld [vmem:[%s52 + $0x70] sm:$0xff]
    %v99 = vld [vmem:[%s52 + $0x78] sm:$0xff]
    %v100 = vld [vmem:[#allocation2] sm:$0xff]
    %v101 = vmul.f32 %v68, %v84
    %v102 = vmul.f32 %v69, %v85
    %v103 = vmul.f32 %v70, %v86
    %v104 = vmul.f32 %v71, %v87
    %v105 = vmul.f32 %v72, %v88
    %v106 = vmul.f32 %v73, %v89
    %v107 = vmul.f32 %v74, %v90
    %v108 = vmul.f32 %v75, %v91
    %v109 = vmul.f32 %v76, %v92
    %v110 = vmul.f32 %v77, %v93
    %v111 = vmul.f32 %v78, %v94
    %v112 = vmul.f32 %v79, %v95
    %v113 = vmul.f32 %v80, %v96
    %v114 = vmul.f32 %v81, %v97
    %v115 = vmul.f32 %v82, %v98
    %v116 = vmul.f32 %v83, %v99
    %v117 = vadd.f32 %v101, %v102
    %v118 = vadd.f32 %v117, %v103
    %v119 = vadd.f32 %v118, %v104
    %v120 = vadd.f32 %v119, %v105
    %v121 = vadd.f32 %v120, %v106
    %v122 = vadd.f32 %v121, %v107
    %v123 = vadd.f32 %v122, %v108
    %v124 = vadd.f32 %v123, %v109
    %v125 = vadd.f32 %v124, %v110
    %v126 = vadd.f32 %v125, %v111
    %v127 = vadd.f32 %v126, %v112
    %v128 = vadd.f32 %v127, %v113
    %v129 = vadd.f32 %v128, %v114
    %v130 = vadd.f32 %v129, %v115
    %v131 = vadd.f32 %v130, %v116
    %132 = vadd.xlane.f32.xlu0 %v131
    %v133 = vpop.xlane.xlu0 %132
    %v134 = vadd.f32 %v100, %v133
    %vm135 = vcmask 7168
    %136 = vst.msk [vmem:[#allocation2] sm:$0xff] %vm135, %v134
    %v137 = vld [vmem:[#allocation3] sm:$0xff]
    %v138 = vadd.f32 %v68, %v69
    %v139 = vadd.f32 %v138, %v70
    %v140 = vadd.f32 %v139, %v71
    %v141 = vadd.f32 %v140, %v72
    %v142 = vadd.f32 %v141, %v73
    %v143 = vadd.f32 %v142, %v74
    %v144 = vadd.f32 %v143, %v75
    %v145 = vadd.f32 %v144, %v76
    %v146 = vadd.f32 %v145, %v77
    %v147 = vadd.f32 %v146, %v78
    %v148 = vadd.f32 %v147, %v79
    %v149 = vadd.f32 %v148, %v80
    %v150 = vadd.f32 %v149, %v81
    %v151 = vadd.f32 %v150, %v82
    %v152 = vadd.f32 %v151, %v83
    %153 = vadd.xlane.f32.xlu0 %v152
    %v154 = vpop.xlane.xlu0 %153
    %v155 = vadd.f32 %v137, %v154
    %156 = vst.msk [vmem:[#allocation3] sm:$0xff] %vm135, %v155
    %v157 = vld [vmem:[#allocation4] sm:$0xff]
    %v158 = vadd.f32 %v84, %v85
    %v159 = vadd.f32 %v158, %v86
    %v160 = vadd.f32 %v159, %v87
    %v161 = vadd.f32 %v160, %v88
    %v162 = vadd.f32 %v161, %v89
    %v163 = vadd.f32 %v162, %v90
    %v164 = vadd.f32 %v163, %v91
    %v165 = vadd.f32 %v164, %v92
    %v166 = vadd.f32 %v165, %v93
    %v167 = vadd.f32 %v166, %v94
    %v168 = vadd.f32 %v167, %v95
    %v169 = vadd.f32 %v168, %v96
    %v170 = vadd.f32 %v169, %v97
    %v171 = vadd.f32 %v170, %v98
    %v172 = vadd.f32 %v171, %v99
    %173 = vadd.xlane.f32.xlu0 %v172
    %v174 = vpop.xlane.xlu0 %173
    %v175 = vadd.f32 %v157, %v174
    %176 = vst.msk [vmem:[#allocation4] sm:$0xff] %vm135, %v175
  $region17: #{dice_mean_loss.1} parent=0 // pred_fallthru
    _
  // Predicated region
  $region18: #{dice_mean_loss.1} parent=0 // pred_check
    %p177 = pneg %p55
  $region19: #{dice_mean_loss.1} parent=0 // pred_check_branch
    %179 = sbr.rel (%p177) target = $region21
  $region20: #{dice_mean_loss.1} parent=0 // pred_region
    %v180 = vld [vmem:[#allocation2] sm:$0xff]
    %v181 = vld [vmem:[#allocation3] sm:$0xff]
    %v182 = vld [vmem:[#allocation4] sm:$0xff]
    %184 = vrot.lane.b32.xlu0 %v181, 1
    %v185 = vpop.permute.xlu0 %184
    %188 = vrot.lane.b32.xlu0 %v182, 2
    %v189 = vpop.permute.xlu0 %188
    %vm191 = vcmask 7168
    %v192 = vsel %vm191, %v180, %v185
    %vm193 = vcmask 15360
    %v194 = vsel %vm193, %v192, %v189
    %vm195 = vcmask 23552
    %196 = vst.msk [vmem:[%s2] sm:$0xff] %vm195, %v194
  $region21: #{dice_mean_loss.1} parent=0 // pred_fallthru
    _
  // Predicated region
  $region22: #{dice_mean_loss.1} parent=0 // pred_check
    _
  $region23: #{dice_mean_loss.1} parent=0 // pred_check_branch
    %198 = sbr.rel (0) target = $region25
  $region24: #{dice_mean_loss.1} parent=0 // pred_region
    _
  $region25: #{dice_mean_loss.1} parent=0 // pred_fallthru
    _
  // Predicated region
  $region26: #{dice_mean_loss.1} parent=0 // pred_check
    _
  $region27: #{dice_mean_loss.1} parent=0 // pred_check_branch
    %200 = sbr.rel (0) target = $region29
  $region28: #{dice_mean_loss.1} parent=0 // pred_region
    _
  $region29: #{dice_mean_loss.1} parent=0 // pred_fallthru
    _

</llo_original>
